<compile_context>
chip_gen: v6e
topology: v6e:2x2x1
jax: 0.10.0
libtpu: 0.0.40
codegen_flags: <defaults>
</compile_context>

<pallas_src>
import functools

import jax
import jax.numpy as jnp
from jax.experimental import pallas as pl
from jax.experimental.pallas import tpu as pltpu


def _round_up(n, m):
    return ((n + m - 1) // m) * m


def _addcoords_kernel(x_ref, o_ref, *, C, X, Y, sblk, with_r):
    # x_ref: (1, C, sblk)   o_ref: (1, C_out, sblk)   over flattened spatial S=X*Y
    dt = o_ref.dtype

    # --- bulk pass-through of the C input channels (lane+sublane dense copy) ---
    o_ref[:, :C, :] = x_ref[...]

    # --- coordinate channels for this spatial tile (batch-invariant, tiny) ---
    s0 = pl.program_id(1) * sblk  # global flattened-spatial offset of this tile
    f = (s0 + jax.lax.broadcasted_iota(jnp.int32, (1, 1, sblk), 2)).astype(jnp.float32)
    # Recover (i, j) from the flattened index f = i*Y + j without integer div/mod.
    # Exact while f < ~2^23 (asserted in the wrapper); keep /Y a TRUE divide —
    # never strength-reduce it to *(1/Y).
    i = jnp.floor((f + 0.5) / Y)
    j = f - i * Y

    # Same normalization as PyTorch (X==1 / Y==1 -> nan, like torch 0/0).
    sx = 2.0 / (X - 1) if X > 1 else float("nan")
    sy = 2.0 / (Y - 1) if Y > 1 else float("nan")
    xx = i * sx - 1.0
    yy = j * sy - 1.0

    coords = [xx, yy]
    if with_r:
        rr = jnp.sqrt((xx - 0.5) ** 2 + (yy - 0.5) ** 2)
        coords.append(rr)
    # Single contiguous store of all coordinate rows (C_out == C + n_coord).
    o_ref[:, C:, :] = jnp.concatenate(coords, axis=1).astype(dt)


def _pick_sblk(S, B, C, C_out, itemsize, vmem_budget_bytes):
    """Spatial tile size (multiple of 128) for lane-dense, pipelined blocks.

    Constraints (per perf review):
      * account for sublane padding of C / C_out (8 rows f32, 16 bf16, 32 int8)
      * target ~2 MiB per (in+out) tile pair (mem-bound roofline plateau)
      * hard cap: double-buffered footprint <= vmem_budget_bytes
      * prefer >= 4 total grid steps (DMA/compute overlap + v7x 2-TC split)
    """
    sub = max(8, 32 // itemsize)                       # sublane rows per dtype
    rows = _round_up(C, sub) + _round_up(C_out, sub)   # padded in+out rows
    per_lane = rows * itemsize                         # bytes per spatial lane

    hard_cap = max(128, (vmem_budget_bytes // 2 // per_lane) // 128 * 128)
    target = max(128, ((2 << 20) // per_lane) // 128 * 128)
    sblk = min(hard_cap, target, _round_up(S, 128))

    # Ensure enough grid steps for pipelining / both v7x TensorCores.
    while sblk > 128 and B * pl.cdiv(S, sblk) < 4:
        sblk = max(128, _round_up(sblk // 2, 128))
    return sblk, per_lane


def add_coords(x, with_r: bool = False, *, vmem_tile_budget_bytes: int = 8 << 20):
    """Pallas implementation of AddCoords.forward for NCHW input x."""
    B, C, X, Y = x.shape
    n_coord = 3 if with_r else 2
    C_out = C + n_coord
    S = X * Y
    itemsize = jnp.dtype(x.dtype).itemsize

    sblk, per_lane = _pick_sblk(S, B, C, C_out, itemsize, vmem_tile_budget_bytes)
    n_s = pl.cdiv(S, sblk)   # partial last block: OOB lanes masked on store

    # Float floor-division trick exactness guard (covers the masked tail too).
    assert S + sblk < (1 << 23), (
        "AddCoords: X*Y too large for the f32 index-recovery trick; "
        "switch to exact integer div/mod.")

    x3 = x.reshape(B, C, S)  # lane-dense layout; free reshape for contiguous NCHW

    kernel = functools.partial(
        _addcoords_kernel, C=C, X=X, Y=Y, sblk=sblk, with_r=with_r)

    # Double-buffered tile footprint (padded sublanes) + headroom for the limit.
    footprint = 2 * per_lane * sblk
    vmem_limit = int(min(32 << 20, max(16 << 20, 2 * footprint)))

    bytes_accessed = (B * C * S + B * C_out * S) * itemsize
    flops = B * S * (8 + (5 if with_r else 0))
    transcendentals = B * S if with_r else 0

    out3 = pl.pallas_call(
        kernel,
        out_shape=jax.ShapeDtypeStruct((B, C_out, S), x.dtype),
        grid=(B, n_s),
        in_specs=[pl.BlockSpec((1, C, sblk), lambda b, s: (b, 0, s))],
        out_specs=pl.BlockSpec((1, C_out, sblk), lambda b, s: (b, 0, s)),
        compiler_params=pltpu.CompilerParams(
            dimension_semantics=("parallel", "parallel"),
            vmem_limit_bytes=vmem_limit),
        cost_estimate=pl.CostEstimate(
            flops=flops,
            transcendentals=transcendentals,
            bytes_accessed=bytes_accessed),
    )(x3)

    return out3.reshape(B, C_out, X, Y)


def add_coords_ref(x, with_r: bool = False):
    """Pure-JAX reference mirroring the PyTorch semantics (for verification)."""
    B, C, X, Y = x.shape
    xx = jnp.broadcast_to(
        (jnp.arange(X, dtype=jnp.float32) / (X - 1) * 2 - 1)[None, None, :, None],
        (B, 1, X, Y)).astype(x.dtype)
    yy = jnp.broadcast_to(
        (jnp.arange(Y, dtype=jnp.float32) / (Y - 1) * 2 - 1)[None, None, None, :],
        (B, 1, X, Y)).astype(x.dtype)
    parts = [x, xx, yy]
    if with_r:
        rr = jnp.sqrt((xx.astype(jnp.float32) - 0.5) ** 2 +
                      (yy.astype(jnp.float32) - 0.5) ** 2).astype(x.dtype)
        parts.append(rr)
    return jnp.concatenate(parts, axis=1)


if __name__ == "__main__":
    key = jax.random.PRNGKey(0)

    # Main case (module-implied small shape).
    B, C, X, Y = 2, 4, 16, 16
    x = jax.random.normal(key, (B, C, X, Y), dtype=jnp.float32)

    out = add_coords(x, with_r=False)
    out = jax.block_until_ready(out)
    ref = add_coords_ref(x, with_r=False)
    assert out.shape == (B, C + 2, X, Y), out.shape
    assert jnp.allclose(out, ref, atol=1e-6), "mismatch (with_r=False)"

    out_r = add_coords(x, with_r=True)
    out_r = jax.block_until_ready(out_r)
    ref_r = add_coords_ref(x, with_r=True)
    assert out_r.shape == (B, C + 3, X, Y), out_r.shape
    assert jnp.allclose(out_r, ref_r, atol=1e-6), "mismatch (with_r=True)"

    # Odd spatial size + B=1: exercises the cdiv grid with a masked partial tail.
    x2 = jax.random.normal(jax.random.PRNGKey(1), (1, 3, 9, 20), dtype=jnp.float32)
    out2 = jax.block_until_ready(add_coords(x2, with_r=True))
    ref2 = add_coords_ref(x2, with_r=True)
    assert out2.shape == (1, 6, 9, 20), out2.shape
    assert jnp.allclose(out2, ref2, atol=1e-6), "mismatch (odd spatial)"

    print("KERNEL_OK")
</pallas_src>

<mosaic_0001>
module attributes {stable_mosaic.version = 11 : i64} {
  func.func @_addcoords_kernel(%arg0: i32, %arg1: i32, %arg2: memref<1x4x128xf32, #tpu.memory_space<vmem>>, %arg3: memref<1x6x128xf32, #tpu.memory_space<vmem>>) attributes {dimension_semantics = [#tpu.dimension_semantics<parallel>, #tpu.dimension_semantics<parallel>], iteration_bounds = array<i64: 2, 2>, scalar_prefetch = 0 : i64, scratch_operands = 0 : i64, tpu.core_type = #tpu.core_type<tc>, window_params = [{transform_indices = @transform_0, window_bounds = array<i64: 1, 4, 128>}, {transform_indices = @transform_1, window_bounds = array<i64: 1, 6, 128>}]} {
    %c0 = arith.constant 0 : index
    %c0_0 = arith.constant 0 : index
    %c0_1 = arith.constant 0 : index
    %0 = vector.load %arg2[%c0, %c0_0, %c0_1] : memref<1x4x128xf32, #tpu.memory_space<vmem>>, vector<1x4x128xf32>
    %c0_2 = arith.constant 0 : index
    %c0_3 = arith.constant 0 : index
    %c0_4 = arith.constant 0 : index
    %1 = vector.load %arg3[%c0_2, %c0_3, %c0_4] : memref<1x6x128xf32, #tpu.memory_space<vmem>>, vector<1x4x128xf32>
    tpu.vector_store %arg3[%c0_2, %c0_3, %c0_4], %0 {strides = array<i32>} : memref<1x6x128xf32, #tpu.memory_space<vmem>>, vector<1x4x128xf32>,
    %c128_i32 = arith.constant 128 : i32
    %2 = arith.muli %arg1, %c128_i32 : i32
    %3 = tpu.iota {dimensions = array<i32: 2>} : vector<1x1x128xi32>
    %4 = vector.broadcast %2 : i32 to vector<1x1x128xi32>
    %5 = arith.addi %4, %3 : vector<1x1x128xi32>
    %6 = arith.sitofp %5 : vector<1x1x128xi32> to vector<1x1x128xf32>
    %cst = arith.constant 5.000000e-01 : f32
    %7 = vector.broadcast %cst : f32 to vector<1x1x128xf32>
    %8 = arith.addf %6, %7 : vector<1x1x128xf32>
    %cst_5 = arith.constant 1.600000e+01 : f32
    %9 = vector.broadcast %cst_5 : f32 to vector<1x1x128xf32>
    %10 = arith.divf %8, %9 : vector<1x1x128xf32>
    %11 = math.floor %10 : vector<1x1x128xf32>
    %cst_6 = arith.constant 1.600000e+01 : f32
    %12 = vector.broadcast %cst_6 : f32 to vector<1x1x128xf32>
    %13 = arith.mulf %11, %12 : vector<1x1x128xf32>
    %14 = arith.subf %6, %13 : vector<1x1x128xf32>
    %cst_7 = arith.constant 0.13333334 : f32
    %15 = vector.broadcast %cst_7 : f32 to vector<1x1x128xf32>
    %16 = arith.mulf %11, %15 : vector<1x1x128xf32>
    %cst_8 = arith.constant 1.000000e+00 : f32
    %17 = vector.broadcast %cst_8 : f32 to vector<1x1x128xf32>
    %18 = arith.subf %16, %17 : vector<1x1x128xf32>
    %cst_9 = arith.constant 0.13333334 : f32
    %19 = vector.broadcast %cst_9 : f32 to vector<1x1x128xf32>
    %20 = arith.mulf %14, %19 : vector<1x1x128xf32>
    %cst_10 = arith.constant 1.000000e+00 : f32
    %21 = vector.broadcast %cst_10 : f32 to vector<1x1x128xf32>
    %22 = arith.subf %20, %21 : vector<1x1x128xf32>
    %23 = tpu.concatenate %18, %22 in 1 : vector<1x1x128xf32>, vector<1x1x128xf32> -> vector<1x2x128xf32>
    %c0_11 = arith.constant 0 : index
    %c4 = arith.constant 4 : index
    %c0_12 = arith.constant 0 : index
    %24 = vector.load %arg3[%c0_11, %c4, %c0_12] : memref<1x6x128xf32, #tpu.memory_space<vmem>>, vector<1x2x128xf32>
    tpu.vector_store %arg3[%c0_11, %c4, %c0_12], %23 {strides = array<i32>} : memref<1x6x128xf32, #tpu.memory_space<vmem>>, vector<1x2x128xf32>,
    return
  }
  func.func @transform_0(%arg0: i32, %arg1: i32) -> (i32, i32, i32) {
    %c0_i32 = arith.constant 0 : i32
    %c0_i32_0 = arith.constant 0 : i32
    return %arg0, %c0_i32, %arg1 : i32, i32, i32
  }
  func.func @transform_1(%arg0: i32, %arg1: i32) -> (i32, i32, i32) {
    %c0_i32 = arith.constant 0 : i32
    %c0_i32_0 = arith.constant 0 : i32
    return %arg0, %c0_i32, %arg1 : i32, i32, i32
  }
}

</mosaic_0001>

<llo_original>
// kernel: tpu_custom_call.1
$region0: #{tpu_custom_call.1}
  #allocation0 [shape = 'u32[]', space=smem, size = 0x4, offset = 0x4, fixed_abs, tag = 'smem constant byte address 0x4 - core index']
  #allocation1 [shape = 'u32[144,128]{1,0:T(1,128)}', space=vmem, size = 0x12000, scoped, tag = 'internal scratch']
  %s0 = inlined_call_operand.hbm [shape: f32[2,4,256], index: 0, kind: input, shape index: {}]
  %s1 = inlined_call_operand.vmem [shape: f32[2,6,256], index: 1, kind: output, shape index: {}]
  %s2 = sld [smem:[#allocation0]]
  $region41: #{tpu_custom_call.1} parent=0
    _
  %s4 = ssub.s32 1, %s2
  %s5 = scalar_select 0, %s4, %s2
  $region1: #{tpu_custom_call.1} parent=0
    #allocation2 [shape = 'u8[4096]{0}', space=vmem, size = 0x1000, scoped, tag = 'input window, operand 0']
    #allocation3 [shape = 's32[2]{0}', space=sflag, size = 0x8, scoped, tag = 'scoped memory for tpu_custom_call.1']
    %6 = vsyncpa [#allocation3], 0
    %s7 = scalar_lea.sflag [#allocation3], 1
    %8 = vsyncpa %s7, 0
    loop: start=0, step=1, limit=6
    $region2: #{tpu_custom_call.1} parent=1 // loop_pre_header
      _
    $region3: #{tpu_custom_call.1} parent=1 // loop_header
      %s10 = sphi 0, %s14
      %p11 = scmp.ge.s32.totalorder %s10, 6
      %s17 = sphi 0, %s29
      %s18 = sphi 0, %s25
      %s19 = sphi 0, %s17
      %s20 = sphi 0, %s18
      %s21 = sphi 0, %s19
      %s22 = sphi 0, %s20
      %s34 = sphi 0, %s36
      %s37 = sphi 0, %s34
      %s38 = sphi 0, %s37
      %s54 = sphi 0, %s38
      %s62 = sphi 0, %s64
      %s65 = sphi 0, %s62
      %s66 = sphi 0, %s65
      %s82 = sphi 0, %s66
    $region4: #{tpu_custom_call.1} parent=1 // loop_header_branch
      %13 = sbr.rel (%p11) target = $region8
    $region5: #{tpu_custom_call.1} parent=1 // loop_body
      %s15 = ssub.s32 %s10, 1
      %s16 = ssub.s32 %s10, 2
      %s23 = sadd.s32 1, %s18
      %p24 = scmp.ge.s32.totalorder %s23, 2
      %s25 = scalar_select %p24, 0, %s23
      %s26 = sadd.s32 1, %s17
      %s27 = scalar_select %p24, %s26, %s17
      %p28 = scmp.ge.s32.totalorder %s27, 2
      %s29 = scalar_select %p28, 0, %s27
      %s30 = ssub.s32 %s17, %s29
      %s31 = ssub.s32 %s18, %s25
      %s32 = sor.u32 %s30, %s31
      %p33 = scmp.eq.s32.totalorder %s32, 0
      %s35 = sadd.s32 %s34, 1
      %s36 = scalar_select %p33, %s34, %s35
      %p39 = pneg %p33
      %p40 = scmp.eq.s32.totalorder %s10, 3
      %p41 = por %p39, %p40
      %p42 = scmp.ne.s32.totalorder %s34, %s37
      %p43 = scmp.eq.s32.totalorder %s10, 0
      %p44 = por %p42, %p43
      %p45 = scmp.ne.s32.totalorder %s34, %s37
      %p46 = scmp.eq.s32.totalorder %s15, 3
      %p47 = por %p45, %p46
      %p48 = scmp.ne.s32.totalorder %s37, %s38
      %p49 = scmp.eq.s32.totalorder %s15, 0
      %p50 = por %p48, %p49
      %p51 = scmp.ne.s32.totalorder %s37, %s38
      %p52 = scmp.eq.s32.totalorder %s16, 3
      %p53 = por %p51, %p52
      %p55 = scmp.ne.s32.totalorder %s38, %s54
      %p56 = scmp.eq.s32.totalorder %s16, 0
      %p57 = por %p55, %p56
      %s58 = ssub.s32 %s17, %s29
      %s59 = ssub.s32 %s18, %s25
      %s60 = sor.u32 %s58, %s59
      %p61 = scmp.eq.s32.totalorder %s60, 0
      %s63 = sadd.s32 %s62, 1
      %s64 = scalar_select %p61, %s62, %s63
      %p67 = pneg %p61
      %p68 = scmp.eq.s32.totalorder %s10, 3
      %p69 = por %p67, %p68
      %p70 = scmp.ne.s32.totalorder %s62, %s65
      %p71 = scmp.eq.s32.totalorder %s10, 0
      %p72 = por %p70, %p71
      %p73 = scmp.ne.s32.totalorder %s62, %s65
      %p74 = scmp.eq.s32.totalorder %s15, 3
      %p75 = por %p73, %p74
      %p76 = scmp.ne.s32.totalorder %s65, %s66
      %p77 = scmp.eq.s32.totalorder %s15, 0
      %p78 = por %p76, %p77
      %p79 = scmp.ne.s32.totalorder %s65, %s66
      %p80 = scmp.eq.s32.totalorder %s16, 3
      %p81 = por %p79, %p80
      %p83 = scmp.ne.s32.totalorder %s66, %s82
      %p84 = scmp.eq.s32.totalorder %s16, 0
      %p85 = por %p83, %p84
      %p86 = scmp.le.s32.totalorder 1, %s10
      %p87 = scmp.lt.s32.totalorder %s10, 5
      %p88 = pnand %p86, %p87
      %p89 = pneg %p88
      // Predicated region
      $region9: #{tpu_custom_call.1} parent=5 // pred_check
        _
      $region10: #{tpu_custom_call.1} parent=5 // pred_check_branch
        %91 = sbr.rel (%p88) target = $region12
      $region11: #{tpu_custom_call.1} parent=5 // pred_region
        %s92 = ssub.s32 %s10, 1
      $region12: #{tpu_custom_call.1} parent=5 // pred_fallthru
        _
      %p93 = scmp.lt.s32.totalorder %s10, 4
      // Predicated region
      $region13: #{tpu_custom_call.1} parent=5 // pred_check
        %p94 = pneg %p93
      $region14: #{tpu_custom_call.1} parent=5 // pred_check_branch
        %96 = sbr.rel (%p94) target = $region16
      $region15: #{tpu_custom_call.1} parent=5 // pred_region
        // Predicated region
        $region17: #{tpu_custom_call.1} parent=15 // pred_check
          %p97 = pneg %p44
        $region18: #{tpu_custom_call.1} parent=15 // pred_check_branch
          %99 = sbr.rel (%p97) target = $region20
        $region19: #{tpu_custom_call.1} parent=15 // pred_region
          %s100 = sand.u32 %s34, 1
          %s101 = scalar_lea.sflag [#allocation3], %s100
          %s102 = sand.u32 %s34, 1
          %s103 = smul.addr %s102, 4
          %s104 = scalar_lea.vmem [#allocation2], %s103
          %s106 = ssub.s32 64, 64
          %107 = vsyncadd %s101, %s106
          %s108 = smul.addr %s17, 2
          %s109 = sadd.s32 %s18, %s108
          %s110 = smul.addr %s109, 64
          %s111 = scalar_lea.hbm %s0, %s110
          %s113 = sshll.u32 %s104, 4
          %s114 = int_to_ptr.vmem [resolvable:$true] %s113
          %116 = dma.hbm_to_vmem [thread:$0]  %s111, 64, %s114, %s101
        $region20: #{tpu_custom_call.1} parent=15 // pred_fallthru
          _
      $region16: #{tpu_custom_call.1} parent=5 // pred_fallthru
        _
      %p117 = scmp.le.s32.totalorder 1, %s10
      %p118 = scmp.lt.s32.totalorder %s10, 5
      %p119 = pnand %p117, %p118
      %p120 = pneg %p119
      // Predicated region
      $region21: #{tpu_custom_call.1} parent=5 // pred_check
        _
      $region22: #{tpu_custom_call.1} parent=5 // pred_check_branch
        %122 = sbr.rel (%p119) target = $region24
      $region23: #{tpu_custom_call.1} parent=5 // pred_region
        %s123 = ssub.s32 %s10, 1
        %s124 = sand.u32 %s37, 1
        %s125 = scalar_lea.sflag [#allocation3], %s124
        %s126 = sand.u32 %s37, 1
        %s127 = smul.addr %s126, 4
        %s128 = scalar_lea.vmem [#allocation2], %s127
        // Predicated region
        $region25: #{tpu_custom_call.1} parent=23 // pred_check
          %p129 = pneg %p50
        $region26: #{tpu_custom_call.1} parent=23 // pred_check_branch
          %131 = sbr.rel (%p129) target = $region28
        $region27: #{tpu_custom_call.1} parent=23 // pred_region
          %132 = dma.done %s125, 64
        $region28: #{tpu_custom_call.1} parent=23 // pred_fallthru
          _
        %s133 = sand.u32 %s37, 1
        %s134 = scalar_lea.sflag [#allocation3], %s133
        %s135 = sand.u32 %s37, 1
        %s136 = smul.addr %s135, 4
        %s137 = scalar_lea.vmem [#allocation2], %s136
        %p138 = pneg %p50
        %p139 = pneg %p47
        %p140 = pneg %p78
        %p141 = pneg %p75
        %p142 = scmp.lt.s32.totalorder %s19, 1
        %s143 = scalar_select %p142, %s19, 1
        %p144 = scmp.lt.s32.totalorder %s20, 1
        %s145 = scalar_select %p144, %s20, 1
        %s146 = smul.addr %s143, 2
        %s147 = sadd.s32 %s145, %s146
        %s148 = smul.addr %s147, 8
        %s149 = scalar_lea.vmem %s1, %s148
        %p150 = scmp.lt.s32.totalorder %s19, 1
        %s151 = scalar_select %p150, %s19, 1
        %p152 = scmp.lt.s32.totalorder %s20, 1
        %s153 = scalar_select %p152, %s20, 1
        %s154 = smul.addr %s151, 2
        %s155 = sadd.s32 %s153, %s154
        %s156 = smul.addr %s155, 8
        %s157 = scalar_lea.vmem %s1, %s156
        %v158 = vld [vmem:[%s128] sm:$0xf]
        %159 = vst [vmem:[%s157] sm:$0xf] %v158
        %s160 = smul.u32 %s20, 128
        %v161 = vlaneseq
        %v162 = vand.u32 %v161, 127
        %v163 = vstv %s160
        %v164 = vadd.s32 %v163, %v162
        %v165 = vcvt.s32.f32 %v164
        %v166 = vadd.f32 %v165, 0.5
        %v167 = vrcp.pop 16.0
        %v168 = vmul.f32 %v166, %v167
        %v169 = vfloor.f32 %v168
        %v170 = vmul.f32 %v169, 16.0
        %v171 = vsub.f32 %v165, %v170
        %v172 = vmul.f32 %v169, 0.13333334
        %v173 = vsub.f32 %v172, 1.0
        %v174 = vmul.f32 %v171, 0.13333334
        %v175 = vsub.f32 %v174, 1.0
        %vm176 = vcmask 1040384
        %v177 = vsel %vm176, %v173, %v175
        %178 = vst [vmem:[%s157 + $0x4] sm:$0x3] %v177
        %p179 = scmp.lt.s32.totalorder %s19, 1
        %s180 = scalar_select %p179, %s19, 1
        %p181 = scmp.lt.s32.totalorder %s20, 1
        %s182 = scalar_select %p181, %s20, 1
        %s183 = smul.addr %s180, 2
        %s184 = sadd.s32 %s182, %s183
        %s185 = smul.addr %s184, 8
        %s186 = scalar_lea.vmem %s1, %s185
        // Predicated region
        $region29: #{tpu_custom_call.1} parent=23 // pred_check
          %p187 = pneg %p75
        $region30: #{tpu_custom_call.1} parent=23 // pred_check_branch
          %189 = sbr.rel (%p187) target = $region32
        $region31: #{tpu_custom_call.1} parent=23 // pred_region
          _
        $region32: #{tpu_custom_call.1} parent=23 // pred_fallthru
          _
      $region24: #{tpu_custom_call.1} parent=5 // pred_fallthru
        _
      %p190 = scmp.le.s32.totalorder 2, %s10
      // Predicated region
      $region33: #{tpu_custom_call.1} parent=5 // pred_check
        %p191 = pneg %p190
      $region34: #{tpu_custom_call.1} parent=5 // pred_check_branch
        %193 = sbr.rel (%p191) target = $region36
      $region35: #{tpu_custom_call.1} parent=5 // pred_region
        %s194 = ssub.s32 %s10, 2
        // Predicated region
        $region37: #{tpu_custom_call.1} parent=35 // pred_check
          %p195 = pneg %p81
        $region38: #{tpu_custom_call.1} parent=35 // pred_check_branch
          %197 = sbr.rel (%p195) target = $region40
        $region39: #{tpu_custom_call.1} parent=35 // pred_region
          %p198 = scmp.lt.s32.totalorder %s21, 1
          %s199 = scalar_select %p198, %s21, 1
          %p200 = scmp.lt.s32.totalorder %s22, 1
          %s201 = scalar_select %p200, %s22, 1
          %s202 = smul.addr %s199, 2
          %s203 = sadd.s32 %s201, %s202
          %s204 = smul.addr %s203, 8
          %s205 = scalar_lea.vmem %s1, %s204
        $region40: #{tpu_custom_call.1} parent=35 // pred_fallthru
          _
      $region36: #{tpu_custom_call.1} parent=5 // pred_fallthru
        _
    $region6: #{tpu_custom_call.1} parent=1 // loop_footer
      %s14 = sadd.s32 1, %s10
    $region7: #{tpu_custom_call.1} parent=1 // loop_footer_branch
      %9 = sbr.rel target = $region3
    $region8: #{tpu_custom_call.1} parent=1 // loop_exit
      _
    %206 = vsyncpa [#allocation3], 1
    %s207 = scalar_lea.sflag [#allocation3], 1
    %208 = vsyncpa %s207, 1

</llo_original>
